<compile_context>
chip_gen: v7x
topology: tpu7x:2x2x1
jax: 0.10.0
libtpu: 0.0.40
codegen_flags: <defaults>
</compile_context>

<pallas_src>
import functools

import jax
import jax.numpy as jnp
from jax.experimental import pallas as pl
from jax.experimental.pallas import tpu as pltpu

BN_EPS = 1e-5
LANE = 128


def _round_up(n, m):
    return ((n + m - 1) // m) * m


def _mlp_kernel(num_layers, out_widths, *refs):
    """Fused MLP forward on one batch tile.

    refs = (x_ref, w_0, ..., w_{L-1}, b_stack_ref, o_ref)
      x_ref:        (tile_b, Dp_in)            padded input tile
      w_l:          (Dp_{l}, Dp_{l+1})         BN-folded, zero-padded weights
      b_stack_ref:  (num_layers, Hmax)         BN-folded, zero-padded biases
      o_ref:        (tile_b, Dp_out)           lane-dense output tile
    """
    x_ref = refs[0]
    b_ref = refs[-2]
    o_ref = refs[-1]
    w_refs = refs[1:-2]

    h = x_ref[...].astype(jnp.float32)
    for l in range(num_layers):
        w = w_refs[l][...]
        out_w = out_widths[l]
        # Linear (+ folded BatchNorm): bias row l, first out_w lanes.
        h = jnp.dot(h, w, preferred_element_type=jnp.float32) + b_ref[l:l + 1, :out_w]
        if l < num_layers - 1:
            # ReLU (hidden layers only). Dropout: identity in eval mode.
            h = jnp.maximum(h, 0.0)
    o_ref[...] = h.astype(o_ref.dtype)


def fold_and_pad_params(params, num_hidden, input_dim):
    """Fold eval-mode BatchNorm into each Linear and zero-pad every feature
    dimension up to a multiple of 128 (lane width).

    Returns (weights, bias_stack, padded_out_widths).
    """
    weights = []
    bias_rows = []  # (bias_row_f32, real_width)
    out_widths = []
    prev = input_dim
    idx = 0
    for _ in range(num_hidden):
        w, b, g, be, rm, rv = params[idx:idx + 6]
        idx += 6
        h = w.shape[1]
        scale = g * jax.lax.rsqrt(rv + BN_EPS)            # (1, h)
        w_f = w.astype(jnp.float32) * scale               # (prev, h)
        b_f = (b.astype(jnp.float32) - rm) * scale + be   # (1, h)
        pi, po = _round_up(prev, LANE), _round_up(h, LANE)
        w_p = jnp.zeros((pi, po), jnp.float32).at[:prev, :h].set(w_f)
        weights.append(w_p)
        bias_rows.append((b_f, h))
        out_widths.append(po)
        prev = h
    # Final Linear -> 1 output, padded to 128 lanes (only column 0 is real).
    w_out, b_out = params[idx], params[idx + 1]
    pi, po = _round_up(prev, LANE), _round_up(1, LANE)
    w_p = jnp.zeros((pi, po), jnp.float32).at[:prev, :1].set(w_out.astype(jnp.float32))
    weights.append(w_p)
    bias_rows.append((b_out.astype(jnp.float32), 1))
    out_widths.append(po)

    h_max = max(out_widths)
    b_stack = jnp.zeros((len(bias_rows), h_max), jnp.float32)
    for l, (b_f, h) in enumerate(bias_rows):
        b_stack = b_stack.at[l, :h].set(b_f[0])
    return weights, b_stack, tuple(out_widths)


def mlp_forward(x, params, *, num_hidden, tile_b=512):
    """x: (B, input_dim). params: flat tuple as produced by init_params."""
    B, d_in = x.shape
    num_layers = num_hidden + 1

    weights, b_stack, out_widths = fold_and_pad_params(params, num_hidden, d_in)
    dp_in = weights[0].shape[0]
    dp_out = out_widths[-1]

    # Large, lane/sublane-friendly batch tile; never bigger than needed.
    tile_b = _round_up(min(tile_b, _round_up(B, LANE)), LANE)
    b_pad = _round_up(B, tile_b)
    x_p = jnp.zeros((b_pad, dp_in), jnp.float32).at[:B, :d_in].set(
        x.astype(jnp.float32))

    kernel = functools.partial(_mlp_kernel, num_layers, out_widths)

    in_specs = [pl.BlockSpec((tile_b, dp_in), lambda i: (i, 0))]
    for w in weights:  # full (grid-invariant) weight blocks
        in_specs.append(pl.BlockSpec(w.shape, lambda i: (0, 0)))
    in_specs.append(pl.BlockSpec(b_stack.shape, lambda i: (0, 0)))
    out_specs = pl.BlockSpec((tile_b, dp_out), lambda i: (i, 0))

    # Rough VMEM budget (double-buffered activations + resident params), with
    # headroom under v7x's 64 MiB physical VMEM.
    max_w = max(out_widths)
    vmem_est = 4 * (2 * tile_b * dp_in + 2 * tile_b * dp_out
                    + 2 * tile_b * max_w
                    + sum(int(w.size) for w in weights) + int(b_stack.size))
    vmem_limit = int(min(60 * 1024 * 1024, max(32 * 1024 * 1024, 2 * vmem_est)))

    out = pl.pallas_call(
        kernel,
        out_shape=jax.ShapeDtypeStruct((b_pad, dp_out), jnp.float32),
        grid_spec=pltpu.PrefetchScalarGridSpec(
            num_scalar_prefetch=0,
            grid=(b_pad // tile_b,),
            in_specs=in_specs,
            out_specs=out_specs,
        ),
        compiler_params=pltpu.CompilerParams(
            dimension_semantics=("parallel",),
            vmem_limit_bytes=vmem_limit,
        ),
    )(x_p, *weights, b_stack)

    return out[:B, :1].astype(x.dtype)


def init_params(key, input_dim, hidden_dims):
    """Deterministic init mirroring PyTorch defaults (uniform(+/-1/sqrt(fan_in)))
    for Linear (weights pre-transposed to [in, out]); identity running stats /
    affine for BatchNorm1d."""
    params = []
    prev = input_dim
    for h in hidden_dims:
        key, kw, kb = jax.random.split(key, 3)
        bound = 1.0 / jnp.sqrt(prev)
        w = jax.random.uniform(kw, (prev, h), jnp.float32, -bound, bound)
        b = jax.random.uniform(kb, (1, h), jnp.float32, -bound, bound)
        gamma = jnp.ones((1, h), jnp.float32)
        beta = jnp.zeros((1, h), jnp.float32)
        run_mean = jnp.zeros((1, h), jnp.float32)
        run_var = jnp.ones((1, h), jnp.float32)
        params += [w, b, gamma, beta, run_mean, run_var]
        prev = h
    key, kw, kb = jax.random.split(key, 3)
    bound = 1.0 / jnp.sqrt(prev)
    w_out = jax.random.uniform(kw, (prev, 1), jnp.float32, -bound, bound)
    b_out = jax.random.uniform(kb, (1, 1), jnp.float32, -bound, bound)
    params += [w_out, b_out]
    return tuple(params)


def reference_forward(x, params, num_hidden):
    """Unfolded eval-mode reference (matches the PyTorch module)."""
    h = x.astype(jnp.float32)
    idx = 0
    for _ in range(num_hidden):
        w, b, g, be, rm, rv = params[idx:idx + 6]
        idx += 6
        h = h @ w + b
        h = (h - rm) / jnp.sqrt(rv + BN_EPS) * g + be
        h = jnp.maximum(h, 0.0)
    return h @ params[idx] + params[idx + 1]


if __name__ == "__main__":
    input_dim = 16
    hidden_dims = [32, 32]
    batch = 6  # deliberately NOT a multiple of 8 to exercise the padded grid

    key = jax.random.PRNGKey(0)
    key, kx = jax.random.split(key)
    x = jax.random.normal(kx, (batch, input_dim), jnp.float32)
    params = init_params(key, input_dim, hidden_dims)

    out = mlp_forward(x, params, num_hidden=len(hidden_dims))
    out = jax.block_until_ready(out)

    ref = reference_forward(x, params, len(hidden_dims))
    assert out.shape == (batch, 1), out.shape
    assert jnp.allclose(out, ref, atol=1e-4, rtol=1e-4), (
        jnp.max(jnp.abs(out - ref)))

    print("KERNEL_OK")
</pallas_src>

<mosaic_0001>
module attributes {stable_mosaic.version = 11 : i64} {
  func.func @_mlp_kernel(%arg0: i32, %arg1: memref<128x128xf32, #tpu.memory_space<vmem>>, %arg2: memref<128x128xf32, #tpu.memory_space<vmem>>, %arg3: memref<128x128xf32, #tpu.memory_space<vmem>>, %arg4: memref<128x128xf32, #tpu.memory_space<vmem>>, %arg5: memref<3x128xf32, #tpu.memory_space<vmem>>, %arg6: memref<128x128xf32, #tpu.memory_space<vmem>>) attributes {dimension_semantics = [#tpu.dimension_semantics<parallel>], iteration_bounds = array<i64: 1>, scalar_prefetch = 0 : i64, scratch_operands = 0 : i64, tpu.core_type = #tpu.core_type<tc>, window_params = [{transform_indices = @transform_0, window_bounds = array<i64: 128, 128>}, {pipeline_mode = #tpu.pipeline_mode<synchronous>, transform_indices = @transform_1, window_bounds = array<i64: 128, 128>}, {pipeline_mode = #tpu.pipeline_mode<synchronous>, transform_indices = @transform_2, window_bounds = array<i64: 128, 128>}, {pipeline_mode = #tpu.pipeline_mode<synchronous>, transform_indices = @transform_3, window_bounds = array<i64: 128, 128>}, {pipeline_mode = #tpu.pipeline_mode<synchronous>, transform_indices = @transform_4, window_bounds = array<i64: 3, 128>}, {transform_indices = @transform_5, window_bounds = array<i64: 128, 128>}]} {
    %c0 = arith.constant 0 : index
    %c0_0 = arith.constant 0 : index
    %0 = vector.load %arg1[%c0, %c0_0] : memref<128x128xf32, #tpu.memory_space<vmem>>, vector<128x128xf32>
    %c0_1 = arith.constant 0 : index
    %c0_2 = arith.constant 0 : index
    %1 = vector.load %arg2[%c0_1, %c0_2] : memref<128x128xf32, #tpu.memory_space<vmem>>, vector<128x128xf32>
    %cst = arith.constant dense<0.000000e+00> : vector<128x128xf32>
    %2 = tpu.matmul %0, %1, %cst {dimension_numbers = #tpu.dot_dimension_numbers<[1], [0], [0], [1], [0, 0, 1, 1], [], []>} : vector<128x128xf32>, vector<128x128xf32>, vector<128x128xf32> -> vector<128x128xf32>
    %c0_3 = arith.constant 0 : index
    %c0_4 = arith.constant 0 : index
    %3 = vector.load %arg5[%c0_3, %c0_4] : memref<3x128xf32, #tpu.memory_space<vmem>>, vector<1x128xf32>
    %4 = vector.broadcast %3 : vector<1x128xf32> to vector<128x128xf32>
    %5 = arith.addf %2, %4 : vector<128x128xf32>
    %cst_5 = arith.constant 0.000000e+00 : f32
    %6 = vector.broadcast %cst_5 : f32 to vector<128x128xf32>
    %7 = arith.maximumf %5, %6 : vector<128x128xf32>
    %c0_6 = arith.constant 0 : index
    %c0_7 = arith.constant 0 : index
    %8 = vector.load %arg3[%c0_6, %c0_7] : memref<128x128xf32, #tpu.memory_space<vmem>>, vector<128x128xf32>
    %cst_8 = arith.constant dense<0.000000e+00> : vector<128x128xf32>
    %9 = tpu.matmul %7, %8, %cst_8 {dimension_numbers = #tpu.dot_dimension_numbers<[1], [0], [0], [1], [0, 0, 1, 1], [], []>} : vector<128x128xf32>, vector<128x128xf32>, vector<128x128xf32> -> vector<128x128xf32>
    %c1 = arith.constant 1 : index
    %c0_9 = arith.constant 0 : index
    %10 = vector.load %arg5[%c1, %c0_9] : memref<3x128xf32, #tpu.memory_space<vmem>>, vector<1x128xf32>
    %11 = vector.broadcast %10 : vector<1x128xf32> to vector<128x128xf32>
    %12 = arith.addf %9, %11 : vector<128x128xf32>
    %cst_10 = arith.constant 0.000000e+00 : f32
    %13 = vector.broadcast %cst_10 : f32 to vector<128x128xf32>
    %14 = arith.maximumf %12, %13 : vector<128x128xf32>
    %c0_11 = arith.constant 0 : index
    %c0_12 = arith.constant 0 : index
    %15 = vector.load %arg4[%c0_11, %c0_12] : memref<128x128xf32, #tpu.memory_space<vmem>>, vector<128x128xf32>
    %cst_13 = arith.constant dense<0.000000e+00> : vector<128x128xf32>
    %16 = tpu.matmul %14, %15, %cst_13 {dimension_numbers = #tpu.dot_dimension_numbers<[1], [0], [0], [1], [0, 0, 1, 1], [], []>} : vector<128x128xf32>, vector<128x128xf32>, vector<128x128xf32> -> vector<128x128xf32>
    %c2 = arith.constant 2 : index
    %c0_14 = arith.constant 0 : index
    %17 = vector.load %arg5[%c2, %c0_14] : memref<3x128xf32, #tpu.memory_space<vmem>>, vector<1x128xf32>
    %18 = vector.broadcast %17 : vector<1x128xf32> to vector<128x128xf32>
    %19 = arith.addf %16, %18 : vector<128x128xf32>
    %c0_15 = arith.constant 0 : index
    %c0_16 = arith.constant 0 : index
    %20 = vector.load %arg6[%c0_15, %c0_16] : memref<128x128xf32, #tpu.memory_space<vmem>>, vector<128x128xf32>
    tpu.vector_store %arg6[%c0_15, %c0_16], %19 {strides = array<i32>} : memref<128x128xf32, #tpu.memory_space<vmem>>, vector<128x128xf32>,
    return
  }
  func.func @transform_0(%arg0: i32) -> (i32, i32) {
    %c0_i32 = arith.constant 0 : i32
    %c0_i32_0 = arith.constant 0 : i32
    return %arg0, %c0_i32 : i32, i32
  }
  func.func @transform_1(%arg0: i32) -> (i32, i32) {
    %c0_i32 = arith.constant 0 : i32
    %c0_i32_0 = arith.constant 0 : i32
    %c0_i32_1 = arith.constant 0 : i32
    return %c0_i32, %c0_i32_0 : i32, i32
  }
  func.func @transform_2(%arg0: i32) -> (i32, i32) {
    %c0_i32 = arith.constant 0 : i32
    %c0_i32_0 = arith.constant 0 : i32
    %c0_i32_1 = arith.constant 0 : i32
    return %c0_i32, %c0_i32_0 : i32, i32
  }
  func.func @transform_3(%arg0: i32) -> (i32, i32) {
    %c0_i32 = arith.constant 0 : i32
    %c0_i32_0 = arith.constant 0 : i32
    %c0_i32_1 = arith.constant 0 : i32
    return %c0_i32, %c0_i32_0 : i32, i32
  }
  func.func @transform_4(%arg0: i32) -> (i32, i32) {
    %c0_i32 = arith.constant 0 : i32
    %c0_i32_0 = arith.constant 0 : i32
    %c0_i32_1 = arith.constant 0 : i32
    return %c0_i32, %c0_i32_0 : i32, i32
  }
  func.func @transform_5(%arg0: i32) -> (i32, i32) {
    %c0_i32 = arith.constant 0 : i32
    %c0_i32_0 = arith.constant 0 : i32
    return %arg0, %c0_i32 : i32, i32
  }
}

</mosaic_0001>

<llo_original>
// kernel: tpu_custom_call.1
$region0: #{tpu_custom_call.1}
  #allocation0 [shape = 'u32[]', space=smem, size = 0x4, offset = 0x4, fixed_abs, tag = 'smem constant byte address 0x4 - core index']
  #allocation1 [shape = 'u32[144,128]{1,0:T(1,128)}', space=vmem, size = 0x12000, scoped, tag = 'internal scratch']
  %s0 = inlined_call_operand.hbm [shape: f32[128,128], index: 0, kind: input, shape index: {}]
  %s1 = inlined_call_operand.hbm [shape: f32[128,128], index: 1, kind: input, shape index: {}]
  %s2 = inlined_call_operand.hbm [shape: f32[128,128], index: 2, kind: input, shape index: {}]
  %s3 = inlined_call_operand.hbm [shape: f32[128,128], index: 3, kind: input, shape index: {}]
  %s4 = inlined_call_operand.vmem [shape: f32[3,128], index: 4, kind: input, shape index: {}]
  %s5 = inlined_call_operand.hbm [shape: f32[128,128], index: 5, kind: output, shape index: {}]
  %s6 = sld [smem:[#allocation0]]
  $region46: #{tpu_custom_call.1} parent=0
    _
  %s8 = ssub.s32 1, %s6
  %s9 = scalar_select 0, %s8, %s6
  $region1: #{tpu_custom_call.1} parent=0
    #allocation2 [shape = 'u8[65536]{0}', space=vmem, size = 0x10000, scoped, tag = 'input window, operand 0, single buffered']
    #allocation3 [shape = 's32[1]{0}', space=sflag, size = 0x4, scoped, tag = 'scoped memory for tpu_custom_call.1']
    #allocation4 [shape = 's32[1]{0}', space=sflag, size = 0x4, scoped, tag = 'scoped memory for tpu_custom_call.1']
    #allocation5 [shape = 'u8[65536]{0}', space=vmem, size = 0x10000, scoped, tag = 'input window, operand 1, single buffered']
    #allocation6 [shape = 's32[1]{0}', space=sflag, size = 0x4, scoped, tag = 'scoped memory for tpu_custom_call.1']
    #allocation7 [shape = 'u8[65536]{0}', space=vmem, size = 0x10000, scoped, tag = 'input window, operand 2, single buffered']
    #allocation8 [shape = 'u8[65536]{0}', space=vmem, size = 0x10000, scoped, tag = 'input window, operand 3, single buffered']
    #allocation9 [shape = 's32[1]{0}', space=sflag, size = 0x4, scoped, tag = 'scoped memory for tpu_custom_call.1']
    #allocation10 [shape = 'u8[65536]{0}', space=vmem, size = 0x10000, scoped, tag = 'output window, operand 0, single buffered']
    %10 = vsyncpa [#allocation3], 0
    %11 = vsyncpa [#allocation6], 0
    %12 = vsyncpa [#allocation9], 0
    %13 = vsyncpa [#allocation4], 0
    // Predicated region
    $region2: #{tpu_custom_call.1} parent=1 // pred_check
      _
    $region3: #{tpu_custom_call.1} parent=1 // pred_check_branch
      %15 = sbr.rel (0) target = $region5
    $region4: #{tpu_custom_call.1} parent=1 // pred_region
      %s17 = ssub.s32 2048, 2048
      %18 = vsyncadd [#allocation3], %s17
      %s19 = sshll.u32 [#allocation2], 4
      %s20 = int_to_ptr.vmem [resolvable:$true] %s19
      %25 = dma.hbm_to_vmem [thread:$0]  %s0, 2048, %s20, [#allocation3], 128, 128, 8
    $region5: #{tpu_custom_call.1} parent=1 // pred_fallthru
      _
    // Predicated region
    $region6: #{tpu_custom_call.1} parent=1 // pred_check
      _
    $region7: #{tpu_custom_call.1} parent=1 // pred_check_branch
      %27 = sbr.rel (0) target = $region9
    $region8: #{tpu_custom_call.1} parent=1 // pred_region
      %s29 = ssub.s32 2048, 2048
      %30 = vsyncadd [#allocation6], %s29
      %s31 = sshll.u32 [#allocation5], 4
      %s32 = int_to_ptr.vmem [resolvable:$true] %s31
      %37 = dma.hbm_to_vmem [thread:$0]  %s1, 2048, %s32, [#allocation6], 128, 128, 8
    $region9: #{tpu_custom_call.1} parent=1 // pred_fallthru
      _
    // Predicated region
    $region10: #{tpu_custom_call.1} parent=1 // pred_check
      _
    $region11: #{tpu_custom_call.1} parent=1 // pred_check_branch
      %39 = sbr.rel (0) target = $region13
    $region12: #{tpu_custom_call.1} parent=1 // pred_region
      %s41 = ssub.s32 2048, 2048
      %42 = vsyncadd [#allocation6], %s41
      %s43 = sshll.u32 [#allocation7], 4
      %s44 = int_to_ptr.vmem [resolvable:$true] %s43
      %49 = dma.hbm_to_vmem [thread:$0]  %s2, 2048, %s44, [#allocation6], 128, 128, 8
    $region13: #{tpu_custom_call.1} parent=1 // pred_fallthru
      _
    // Predicated region
    $region14: #{tpu_custom_call.1} parent=1 // pred_check
      _
    $region15: #{tpu_custom_call.1} parent=1 // pred_check_branch
      %51 = sbr.rel (0) target = $region17
    $region16: #{tpu_custom_call.1} parent=1 // pred_region
      %s53 = ssub.s32 2048, 2048
      %54 = vsyncadd [#allocation9], %s53
      %s55 = sshll.u32 [#allocation8], 4
      %s56 = int_to_ptr.vmem [resolvable:$true] %s55
      %61 = dma.hbm_to_vmem [thread:$0]  %s3, 2048, %s56, [#allocation9], 128, 128, 8
    $region17: #{tpu_custom_call.1} parent=1 // pred_fallthru
      _
    // Predicated region
    $region18: #{tpu_custom_call.1} parent=1 // pred_check
      _
    $region19: #{tpu_custom_call.1} parent=1 // pred_check_branch
      %63 = sbr.rel (0) target = $region21
    $region20: #{tpu_custom_call.1} parent=1 // pred_region
      _
    $region21: #{tpu_custom_call.1} parent=1 // pred_fallthru
      _
    // Predicated region
    $region22: #{tpu_custom_call.1} parent=1 // pred_check
      _
    $region23: #{tpu_custom_call.1} parent=1 // pred_check_branch
      %65 = sbr.rel (0) target = $region25
    $region24: #{tpu_custom_call.1} parent=1 // pred_region
      %66 = dma.done [#allocation3], 2048
    $region25: #{tpu_custom_call.1} parent=1 // pred_fallthru
      _
    // Predicated region
    $region26: #{tpu_custom_call.1} parent=1 // pred_check
      _
    $region27: #{tpu_custom_call.1} parent=1 // pred_check_branch
      %68 = sbr.rel (0) target = $region29
    $region28: #{tpu_custom_call.1} parent=1 // pred_region
      %69 = dma.done [#allocation6], 2048
    $region29: #{tpu_custom_call.1} parent=1 // pred_fallthru
      _
    // Predicated region
    $region30: #{tpu_custom_call.1} parent=1 // pred_check
      _
    $region31: #{tpu_custom_call.1} parent=1 // pred_check_branch
      %71 = sbr.rel (0) target = $region33
    $region32: #{tpu_custom_call.1} parent=1 // pred_region
      %72 = dma.done [#allocation6], 2048
    $region33: #{tpu_custom_call.1} parent=1 // pred_fallthru
      _
    // Predicated region
    $region34: #{tpu_custom_call.1} parent=1 // pred_check
      _
    $region35: #{tpu_custom_call.1} parent=1 // pred_check_branch
      %74 = sbr.rel (0) target = $region37
    $region36: #{tpu_custom_call.1} parent=1 // pred_region
      %75 = dma.done [#allocation9], 2048
    $region37: #{tpu_custom_call.1} parent=1 // pred_fallthru
      _
    %v76 = vld [vmem:[#allocation2] sm:$0xff]
    %v77 = vld [vmem:[#allocation2 + $0x8] sm:$0xff]
    %v78 = vld [vmem:[#allocation2 + $0x10] sm:$0xff]
    %v79 = vld [vmem:[#allocation2 + $0x18] sm:$0xff]
    %v80 = vld [vmem:[#allocation2 + $0x20] sm:$0xff]
    %v81 = vld [vmem:[#allocation2 + $0x28] sm:$0xff]
    %v82 = vld [vmem:[#allocation2 + $0x30] sm:$0xff]
    %v83 = vld [vmem:[#allocation2 + $0x38] sm:$0xff]
    %v84 = vld [vmem:[#allocation2 + $0x40] sm:$0xff]
    %v85 = vld [vmem:[#allocation2 + $0x48] sm:$0xff]
    %v86 = vld [vmem:[#allocation2 + $0x50] sm:$0xff]
    %v87 = vld [vmem:[#allocation2 + $0x58] sm:$0xff]
    %v88 = vld [vmem:[#allocation2 + $0x60] sm:$0xff]
    %v89 = vld [vmem:[#allocation2 + $0x68] sm:$0xff]
    %v90 = vld [vmem:[#allocation2 + $0x70] sm:$0xff]
    %v91 = vld [vmem:[#allocation2 + $0x78] sm:$0xff]
    %v92 = vld [vmem:[#allocation5] sm:$0xff]
    %v93 = vld [vmem:[#allocation5 + $0x8] sm:$0xff]
    %v94 = vld [vmem:[#allocation5 + $0x10] sm:$0xff]
    %v95 = vld [vmem:[#allocation5 + $0x18] sm:$0xff]
    %v96 = vld [vmem:[#allocation5 + $0x20] sm:$0xff]
    %v97 = vld [vmem:[#allocation5 + $0x28] sm:$0xff]
    %v98 = vld [vmem:[#allocation5 + $0x30] sm:$0xff]
    %v99 = vld [vmem:[#allocation5 + $0x38] sm:$0xff]
    %v100 = vld [vmem:[#allocation5 + $0x40] sm:$0xff]
    %v101 = vld [vmem:[#allocation5 + $0x48] sm:$0xff]
    %v102 = vld [vmem:[#allocation5 + $0x50] sm:$0xff]
    %v103 = vld [vmem:[#allocation5 + $0x58] sm:$0xff]
    %v104 = vld [vmem:[#allocation5 + $0x60] sm:$0xff]
    %v105 = vld [vmem:[#allocation5 + $0x68] sm:$0xff]
    %v106 = vld [vmem:[#allocation5 + $0x70] sm:$0xff]
    %v107 = vld [vmem:[#allocation5 + $0x78] sm:$0xff]
    %v108 = vld [vmem:[%s4] sm:$0x1]
    %v109 = vlaneseq
    %v110 = vshrl.u32 %v109, 7
    %v111 = vsub.s32 0, %v110
    %v112 = vrot.slane %v108, %v111
    %113 = vmatprep.subr.mxu0 0.0
    %114 = vmatpush1.msra.mxu0 %v92
    %115 = vmatprep.subr.mxu0 0.0
    %116 = vmatpush1.msra.mxu0 %v93
    %117 = vmatprep.subr.mxu0 0.0
    %118 = vmatpush1.msra.mxu0 %v94
    %119 = vmatprep.subr.mxu0 0.0
    %120 = vmatpush1.msra.mxu0 %v95
    %121 = vmatprep.subr.mxu0 0.0
    %122 = vmatpush1.msra.mxu0 %v96
    %123 = vmatprep.subr.mxu0 0.0
    %124 = vmatpush1.msra.mxu0 %v97
    %125 = vmatprep.subr.mxu0 0.0
    %126 = vmatpush1.msra.mxu0 %v98
    %127 = vmatprep.subr.mxu0 0.0
    %128 = vmatpush1.msra.mxu0 %v99
    %129 = vmatprep.subr.mxu0 0.0
    %130 = vmatpush1.msra.mxu0 %v100
    %131 = vmatprep.subr.mxu0 0.0
    %132 = vmatpush1.msra.mxu0 %v101
    %133 = vmatprep.subr.mxu0 0.0
    %134 = vmatpush1.msra.mxu0 %v102
    %135 = vmatprep.subr.mxu0 0.0
    %136 = vmatpush1.msra.mxu0 %v103
    %137 = vmatprep.subr.mxu0 0.0
    %138 = vmatpush1.msra.mxu0 %v104
    %139 = vmatprep.subr.mxu0 0.0
    %140 = vmatpush1.msra.mxu0 %v105
    %141 = vmatprep.subr.mxu0 0.0
    %142 = vmatpush1.msra.mxu0 %v106
    %143 = vmatprep.subr.mxu0 0.0
    %144 = vmatpush1.msra.mxu0 %v107
    %145 = vmatprep.subr.mxu0 0.0
    %146 = vmatpush1.msra.mxu0 0.0
    %147 = vmatprep.subr.mxu0 0.0
    %148 = vmatpush1.msra.mxu0 0.0
    %149 = vmatprep.subr.mxu0 0.0
    %150 = vmatpush1.msra.mxu0 0.0
    %151 = vmatprep.subr.mxu0 0.0
    %152 = vmatpush1.msra.mxu0 0.0
    %153 = vmatprep.subr.mxu0 0.0
    %154 = vmatpush1.msra.mxu0 0.0
    %155 = vmatprep.subr.mxu0 0.0
    %156 = vmatpush1.msra.mxu0 0.0
    %157 = vmatprep.subr.mxu0 0.0
    %158 = vmatpush1.msra.mxu0 0.0
    %159 = vmatprep.subr.mxu0 0.0
    %160 = vmatpush1.msra.mxu0 0.0
    %161 = vmatprep.subr.mxu0 0.0
    %162 = vmatpush1.msra.mxu0 0.0
    %163 = vmatprep.subr.mxu0 0.0
    %164 = vmatpush1.msra.mxu0 0.0
    %165 = vmatprep.subr.mxu0 0.0
    %166 = vmatpush1.msra.mxu0 0.0
    %167 = vmatprep.subr.mxu0 0.0
    %168 = vmatpush1.msra.mxu0 0.0
    %169 = vmatprep.subr.mxu0 0.0
    %170 = vmatpush1.msra.mxu0 0.0
    %171 = vmatprep.subr.mxu0 0.0
    %172 = vmatpush1.msra.mxu0 0.0
    %173 = vmatprep.subr.mxu0 0.0
    %174 = vmatpush1.msra.mxu0 0.0
    %175 = vmatprep.subr.mxu0 0.0
    %176 = vmatpush1.msra.mxu0 0.0
    %177 = vmatprep.mubr.f32.mxu0 0.0
    %178 = vmatmul.mubr.f32.gmra.mrb[0].mxu0 %v76
    %v179 = vpop.f32.mrb[0].mxu0
    %v180 = vadd.f32 %v112, %v179
    %v181 = vpop.f32.mrb[0].mxu0
    %182 = vmatprep.mubr.f32.mxu0 0.0
    %183 = vmatmul.mubr.f32.gmra.mrb[0].mxu0 %v77
    %v184 = vpop.f32.mrb[0].mxu0
    %v185 = vadd.f32 %v112, %v184
    %v186 = vpop.f32.mrb[0].mxu0
    %187 = vmatprep.mubr.f32.mxu0 0.0
    %188 = vmatmul.mubr.f32.gmra.mrb[0].mxu0 %v78
    %v189 = vpop.f32.mrb[0].mxu0
    %v190 = vadd.f32 %v112, %v189
    %v191 = vpop.f32.mrb[0].mxu0
    %192 = vmatprep.mubr.f32.mxu0 0.0
    %193 = vmatmul.mubr.f32.gmra.mrb[0].mxu0 %v79
    %v194 = vpop.f32.mrb[0].mxu0
    %v195 = vadd.f32 %v112, %v194
    %v196 = vpop.f32.mrb[0].mxu0
    %197 = vmatprep.mubr.f32.mxu0 0.0
    %198 = vmatmul.mubr.f32.gmra.mrb[0].mxu0 %v80
    %v199 = vpop.f32.mrb[0].mxu0
    %v200 = vadd.f32 %v112, %v199
    %v201 = vpop.f32.mrb[0].mxu0
    %202 = vmatprep.mubr.f32.mxu0 0.0
    %203 = vmatmul.mubr.f32.gmra.mrb[0].mxu0 %v81
    %v204 = vpop.f32.mrb[0].mxu0
    %v205 = vadd.f32 %v112, %v204
    %v206 = vpop.f32.mrb[0].mxu0
    %207 = vmatprep.mubr.f32.mxu0 0.0
    %208 = vmatmul.mubr.f32.gmra.mrb[0].mxu0 %v82
    %v209 = vpop.f32.mrb[0].mxu0
    %v210 = vadd.f32 %v112, %v209
    %v211 = vpop.f32.mrb[0].mxu0
    %212 = vmatprep.mubr.f32.mxu0 0.0
    %213 = vmatmul.mubr.f32.gmra.mrb[0].mxu0 %v83
    %v214 = vpop.f32.mrb[0].mxu0
    %v215 = vadd.f32 %v112, %v214
    %v216 = vpop.f32.mrb[0].mxu0
    %217 = vmatprep.mubr.f32.mxu0 0.0
    %218 = vmatmul.mubr.f32.gmra.mrb[0].mxu0 %v84
    %v219 = vpop.f32.mrb[0].mxu0
    %v220 = vadd.f32 %v112, %v219
    %v221 = vpop.f32.mrb[0].mxu0
    %222 = vmatprep.mubr.f32.mxu0 0.0
    %223 = vmatmul.mubr.f32.gmra.mrb[0].mxu0 %v85
    %v224 = vpop.f32.mrb[0].mxu0
    %v225 = vadd.f32 %v112, %v224
    %v226 = vpop.f32.mrb[0].mxu0
    %227 = vmatprep.mubr.f32.mxu0 0.0
    %228 = vmatmul.mubr.f32.gmra.mrb[0].mxu0 %v86
    %v229 = vpop.f32.mrb[0].mxu0
    %v230 = vadd.f32 %v112, %v229
    %v231 = vpop.f32.mrb[0].mxu0
    %232 = vmatprep.mubr.f32.mxu0 0.0
    %233 = vmatmul.mubr.f32.gmra.mrb[0].mxu0 %v87
    %v234 = vpop.f32.mrb[0].mxu0
    %v235 = vadd.f32 %v112, %v234
    %v236 = vpop.f32.mrb[0].mxu0
    %237 = vmatprep.mubr.f32.mxu0 0.0
    %238 = vmatmul.mubr.f32.gmra.mrb[0].mxu0 %v88
    %v239 = vpop.f32.mrb[0].mxu0
    %v240 = vadd.f32 %v112, %v239
    %v241 = vpop.f32.mrb[0].mxu0
    %242 = vmatprep.mubr.f32.mxu0 0.0
    %243 = vmatmul.mubr.f32.gmra.mrb[0].mxu0 %v89
    %v244 = vpop.f32.mrb[0].mxu0
    %v245 = vadd.f32 %v112, %v244
    %v246 = vpop.f32.mrb[0].mxu0
    %247 = vmatprep.mubr.f32.mxu0 0.0
    %248 = vmatmul.mubr.f32.gmra.mrb[0].mxu0 %v90
    %v249 = vpop.f32.mrb[0].mxu0
    %v250 = vadd.f32 %v112, %v249
    %v251 = vpop.f32.mrb[0].mxu0
    %252 = vmatprep.mubr.f32.mxu0 0.0
    %253 = vmatmul.mubr.f32.gmra.mrb[0].mxu0 %v91
    %v254 = vpop.f32.mrb[0].mxu0
    %v255 = vadd.f32 %v112, %v254
    %v256 = vpop.f32.mrb[0].mxu0
    %257 = vdwg.mxu0
    %v258 = vmax.f32 %v180, 0.0
    %v259 = vmax.f32 %v185, 0.0
    %v260 = vmax.f32 %v190, 0.0
    %v261 = vmax.f32 %v195, 0.0
    %v262 = vmax.f32 %v200, 0.0
    %v263 = vmax.f32 %v205, 0.0
    %v264 = vmax.f32 %v210, 0.0
    %v265 = vmax.f32 %v215, 0.0
    %v266 = vmax.f32 %v220, 0.0
    %v267 = vmax.f32 %v225, 0.0
    %v268 = vmax.f32 %v230, 0.0
    %v269 = vmax.f32 %v235, 0.0
    %v270 = vmax.f32 %v240, 0.0
    %v271 = vmax.f32 %v245, 0.0
    %v272 = vmax.f32 %v250, 0.0
    %v273 = vmax.f32 %v255, 0.0
    %v274 = vld [vmem:[#allocation7] sm:$0xff]
    %v275 = vld [vmem:[#allocation7 + $0x8] sm:$0xff]
    %v276 = vld [vmem:[#allocation7 + $0x10] sm:$0xff]
    %v277 = vld [vmem:[#allocation7 + $0x18] sm:$0xff]
    %v278 = vld [vmem:[#allocation7 + $0x20] sm:$0xff]
    %v279 = vld [vmem:[#allocation7 + $0x28] sm:$0xff]
    %v280 = vld [vmem:[#allocation7 + $0x30] sm:$0xff]
    %v281 = vld [vmem:[#allocation7 + $0x38] sm:$0xff]
    %v282 = vld [vmem:[#allocation7 + $0x40] sm:$0xff]
    %v283 = vld [vmem:[#allocation7 + $0x48] sm:$0xff]
    %v284 = vld [vmem:[#allocation7 + $0x50] sm:$0xff]
    %v285 = vld [vmem:[#allocation7 + $0x58] sm:$0xff]
    %v286 = vld [vmem:[#allocation7 + $0x60] sm:$0xff]
    %v287 = vld [vmem:[#allocation7 + $0x68] sm:$0xff]
    %v288 = vld [vmem:[#allocation7 + $0x70] sm:$0xff]
    %v289 = vld [vmem:[#allocation7 + $0x78] sm:$0xff]
    %v290 = vld [vmem:[%s4 + $0x1] sm:$0x1]
    %v291 = vlaneseq
    %v292 = vshrl.u32 %v291, 7
    %v293 = vsub.s32 0, %v292
    %v294 = vrot.slane %v290, %v293
    %295 = vmatprep.subr.mxu0 0.0
    %296 = vmatpush1.msra.mxu0 %v274
    %297 = vmatprep.subr.mxu0 0.0
    %298 = vmatpush1.msra.mxu0 %v275
    %299 = vmatprep.subr.mxu0 0.0
    %300 = vmatpush1.msra.mxu0 %v276
    %301 = vmatprep.subr.mxu0 0.0
    %302 = vmatpush1.msra.mxu0 %v277
    %303 = vmatprep.subr.mxu0 0.0
    %304 = vmatpush1.msra.mxu0 %v278
    %305 = vmatprep.subr.mxu0 0.0
    %306 = vmatpush1.msra.mxu0 %v279
    %307 = vmatprep.subr.mxu0 0.0
    %308 = vmatpush1.msra.mxu0 %v280
    %309 = vmatprep.subr.mxu0 0.0
    %310 = vmatpush1.msra.mxu0 %v281
    %311 = vmatprep.subr.mxu0 0.0
    %312 = vmatpush1.msra.mxu0 %v282
    %313 = vmatprep.subr.mxu0 0.0
    %314 = vmatpush1.msra.mxu0 %v283
    %315 = vmatprep.subr.mxu0 0.0
    %316 = vmatpush1.msra.mxu0 %v284
    %317 = vmatprep.subr.mxu0 0.0
    %318 = vmatpush1.msra.mxu0 %v285
    %319 = vmatprep.subr.mxu0 0.0
    %320 = vmatpush1.msra.mxu0 %v286
    %321 = vmatprep.subr.mxu0 0.0
    %322 = vmatpush1.msra.mxu0 %v287
    %323 = vmatprep.subr.mxu0 0.0
    %324 = vmatpush1.msra.mxu0 %v288
    %325 = vmatprep.subr.mxu0 0.0
    %326 = vmatpush1.msra.mxu0 %v289
    %327 = vmatprep.subr.mxu0 0.0
    %328 = vmatpush1.msra.mxu0 0.0
    %329 = vmatprep.subr.mxu0 0.0
    %330 = vmatpush1.msra.mxu0 0.0
    %331 = vmatprep.subr.mxu0 0.0
    %332 = vmatpush1.msra.mxu0 0.0
    %333 = vmatprep.subr.mxu0 0.0
    %334 = vmatpush1.msra.mxu0 0.0
    %335 = vmatprep.subr.mxu0 0.0
    %336 = vmatpush1.msra.mxu0 0.0
    %337 = vmatprep.subr.mxu0 0.0
    %338 = vmatpush1.msra.mxu0 0.0
    %339 = vmatprep.subr.mxu0 0.0
    %340 = vmatpush1.msra.mxu0 0.0
    %341 = vmatprep.subr.mxu0 0.0
    %342 = vmatpush1.msra.mxu0 0.0
    %343 = vmatprep.subr.mxu0 0.0
    %344 = vmatpush1.msra.mxu0 0.0
    %345 = vmatprep.subr.mxu0 0.0
    %346 = vmatpush1.msra.mxu0 0.0
    %347 = vmatprep.subr.mxu0 0.0
    %348 = vmatpush1.msra.mxu0 0.0
    %349 = vmatprep.subr.mxu0 0.0
    %350 = vmatpush1.msra.mxu0 0.0
    %351 = vmatprep.subr.mxu0 0.0
    %352 = vmatpush1.msra.mxu0 0.0
    %353 = vmatprep.subr.mxu0 0.0
    %354 = vmatpush1.msra.mxu0 0.0
    %355 = vmatprep.subr.mxu0 0.0
    %356 = vmatpush1.msra.mxu0 0.0
    %357 = vmatprep.subr.mxu0 0.0
    %358 = vmatpush1.msra.mxu0 0.0
    %359 = vmatprep.mubr.f32.mxu0 0.0
    %360 = vmatmul.mubr.f32.gmra.mrb[0].mxu0 %v258
    %v361 = vpop.f32.mrb[0].mxu0
    %v362 = vadd.f32 %v294, %v361
    %v363 = vpop.f32.mrb[0].mxu0
    %364 = vmatprep.mubr.f32.mxu0 0.0
    %365 = vmatmul.mubr.f32.gmra.mrb[0].mxu0 %v259
    %v366 = vpop.f32.mrb[0].mxu0
    %v367 = vadd.f32 %v294, %v366
    %v368 = vpop.f32.mrb[0].mxu0
    %369 = vmatprep.mubr.f32.mxu0 0.0
    %370 = vmatmul.mubr.f32.gmra.mrb[0].mxu0 %v260
    %v371 = vpop.f32.mrb[0].mxu0
    %v372 = vadd.f32 %v294, %v371
    %v373 = vpop.f32.mrb[0].mxu0
    %374 = vmatprep.mubr.f32.mxu0 0.0
    %375 = vmatmul.mubr.f32.gmra.mrb[0].mxu0 %v261
    %v376 = vpop.f32.mrb[0].mxu0
    %v377 = vadd.f32 %v294, %v376
    %v378 = vpop.f32.mrb[0].mxu0
    %379 = vmatprep.mubr.f32.mxu0 0.0
    %380 = vmatmul.mubr.f32.gmra.mrb[0].mxu0 %v262
    %v381 = vpop.f32.mrb[0].mxu0
    %v382 = vadd.f32 %v294, %v381
    %v383 = vpop.f32.mrb[0].mxu0
    %384 = vmatprep.mubr.f32.mxu0 0.0
    %385 = vmatmul.mubr.f32.gmra.mrb[0].mxu0 %v263
    %v386 = vpop.f32.mrb[0].mxu0
    %v387 = vadd.f32 %v294, %v386
    %v388 = vpop.f32.mrb[0].mxu0
    %389 = vmatprep.mubr.f32.mxu0 0.0
    %390 = vmatmul.mubr.f32.gmra.mrb[0].mxu0 %v264
    %v391 = vpop.f32.mrb[0].mxu0
    %v392 = vadd.f32 %v294, %v391
    %v393 = vpop.f32.mrb[0].mxu0
    %394 = vmatprep.mubr.f32.mxu0 0.0
    %395 = vmatmul.mubr.f32.gmra.mrb[0].mxu0 %v265
    %v396 = vpop.f32.mrb[0].mxu0
    %v397 = vadd.f32 %v294, %v396
    %v398 = vpop.f32.mrb[0].mxu0
    %399 = vmatprep.mubr.f32.mxu0 0.0
    %400 = vmatmul.mubr.f32.gmra.mrb[0].mxu0 %v266
    %v401 = vpop.f32.mrb[0].mxu0
    %v402 = vadd.f32 %v294, %v401
    %v403 = vpop.f32.mrb[0].mxu0
    %404 = vmatprep.mubr.f32.mxu0 0.0
    %405 = vmatmul.mubr.f32.gmra.mrb[0].mxu0 %v267
    %v406 = vpop.f32.mrb[0].mxu0
    %v407 = vadd.f32 %v294, %v406
    %v408 = vpop.f32.mrb[0].mxu0
    %409 = vmatprep.mubr.f32.mxu0 0.0
    %410 = vmatmul.mubr.f32.gmra.mrb[0].mxu0 %v268
    %v411 = vpop.f32.mrb[0].mxu0
    %v412 = vadd.f32 %v294, %v411
    %v413 = vpop.f32.mrb[0].mxu0
    %414 = vmatprep.mubr.f32.mxu0 0.0
    %415 = vmatmul.mubr.f32.gmra.mrb[0].mxu0 %v269
    %v416 = vpop.f32.mrb[0].mxu0
    %v417 = vadd.f32 %v294, %v416
    %v418 = vpop.f32.mrb[0].mxu0
    %419 = vmatprep.mubr.f32.mxu0 0.0
    %420 = vmatmul.mubr.f32.gmra.mrb[0].mxu0 %v270
    %v421 = vpop.f32.mrb[0].mxu0
    %v422 = vadd.f32 %v294, %v421
    %v423 = vpop.f32.mrb[0].mxu0
    %424 = vmatprep.mubr.f32.mxu0 0.0
    %425 = vmatmul.mubr.f32.gmra.mrb[0].mxu0 %v271
    %v426 = vpop.f32.mrb[0].mxu0
    %v427 = vadd.f32 %v294, %v426
    %v428 = vpop.f32.mrb[0].mxu0
    %429 = vmatprep.mubr.f32.mxu0 0.0
    %430 = vmatmul.mubr.f32.gmra.mrb[0].mxu0 %v272
    %v431 = vpop.f32.mrb[0].mxu0
    %v432 = vadd.f32 %v294, %v431
    %v433 = vpop.f32.mrb[0].mxu0
    %434 = vmatprep.mubr.f32.mxu0 0.0
    %435 = vmatmul.mubr.f32.gmra.mrb[0].mxu0 %v273
    %v436 = vpop.f32.mrb[0].mxu0
    %v437 = vadd.f32 %v294, %v436
    %v438 = vpop.f32.mrb[0].mxu0
    %439 = vdwg.mxu0
    %v440 = vmax.f32 %v362, 0.0
    %v441 = vmax.f32 %v367, 0.0
    %v442 = vmax.f32 %v372, 0.0
    %v443 = vmax.f32 %v377, 0.0
    %v444 = vmax.f32 %v382, 0.0
    %v445 = vmax.f32 %v387, 0.0
    %v446 = vmax.f32 %v392, 0.0
    %v447 = vmax.f32 %v397, 0.0
    %v448 = vmax.f32 %v402, 0.0
    %v449 = vmax.f32 %v407, 0.0
    %v450 = vmax.f32 %v412, 0.0
    %v451 = vmax.f32 %v417, 0.0
    %v452 = vmax.f32 %v422, 0.0
    %v453 = vmax.f32 %v427, 0.0
    %v454 = vmax.f32 %v432, 0.0
    %v455 = vmax.f32 %v437, 0.0
    %v456 = vld [vmem:[#allocation8] sm:$0xff]
    %v457 = vld [vmem:[#allocation8 + $0x8] sm:$0xff]
    %v458 = vld [vmem:[#allocation8 + $0x10] sm:$0xff]
    %v459 = vld [vmem:[#allocation8 + $0x18] sm:$0xff]
    %v460 = vld [vmem:[#allocation8 + $0x20] sm:$0xff]
    %v461 = vld [vmem:[#allocation8 + $0x28] sm:$0xff]
    %v462 = vld [vmem:[#allocation8 + $0x30] sm:$0xff]
    %v463 = vld [vmem:[#allocation8 + $0x38] sm:$0xff]
    %v464 = vld [vmem:[#allocation8 + $0x40] sm:$0xff]
    %v465 = vld [vmem:[#allocation8 + $0x48] sm:$0xff]
    %v466 = vld [vmem:[#allocation8 + $0x50] sm:$0xff]
    %v467 = vld [vmem:[#allocation8 + $0x58] sm:$0xff]
    %v468 = vld [vmem:[#allocation8 + $0x60] sm:$0xff]
    %v469 = vld [vmem:[#allocation8 + $0x68] sm:$0xff]
    %v470 = vld [vmem:[#allocation8 + $0x70] sm:$0xff]
    %v471 = vld [vmem:[#allocation8 + $0x78] sm:$0xff]
    %v472 = vld [vmem:[%s4 + $0x2] sm:$0x1]
    %v473 = vlaneseq
    %v474 = vshrl.u32 %v473, 7
    %v475 = vsub.s32 0, %v474
    %v476 = vrot.slane %v472, %v475
    %477 = vmatprep.subr.mxu0 0.0
    %478 = vmatpush1.msra.mxu0 %v456
    %479 = vmatprep.subr.mxu0 0.0
    %480 = vmatpush1.msra.mxu0 %v457
    %481 = vmatprep.subr.mxu0 0.0
    %482 = vmatpush1.msra.mxu0 %v458
    %483 = vmatprep.subr.mxu0 0.0
    %484 = vmatpush1.msra.mxu0 %v459
    %485 = vmatprep.subr.mxu0 0.0
    %486 = vmatpush1.msra.mxu0 %v460
    %487 = vmatprep.subr.mxu0 0.0
    %488 = vmatpush1.msra.mxu0 %v461
    %489 = vmatprep.subr.mxu0 0.0
    %490 = vmatpush1.msra.mxu0 %v462
    %491 = vmatprep.subr.mxu0 0.0
    %492 = vmatpush1.msra.mxu0 %v463
    %493 = vmatprep.subr.mxu0 0.0
    %494 = vmatpush1.msra.mxu0 %v464
    %495 = vmatprep.subr.mxu0 0.0
    %496 = vmatpush1.msra.mxu0 %v465
    %497 = vmatprep.subr.mxu0 0.0
    %498 = vmatpush1.msra.mxu0 %v466
    %499 = vmatprep.subr.mxu0 0.0
    %500 = vmatpush1.msra.mxu0 %v467
    %501 = vmatprep.subr.mxu0 0.0
    %502 = vmatpush1.msra.mxu0 %v468
    %503 = vmatprep.subr.mxu0 0.0
    %504 = vmatpush1.msra.mxu0 %v469
    %505 = vmatprep.subr.mxu0 0.0
    %506 = vmatpush1.msra.mxu0 %v470
    %507 = vmatprep.subr.mxu0 0.0
    %508 = vmatpush1.msra.mxu0 %v471
    %509 = vmatprep.subr.mxu0 0.0
    %510 = vmatpush1.msra.mxu0 0.0
    %511 = vmatprep.subr.mxu0 0.0
    %512 = vmatpush1.msra.mxu0 0.0
    %513 = vmatprep.subr.mxu0 0.0
    %514 = vmatpush1.msra.mxu0 0.0
    %515 = vmatprep.subr.mxu0 0.0
    %516 = vmatpush1.msra.mxu0 0.0
    %517 = vmatprep.subr.mxu0 0.0
    %518 = vmatpush1.msra.mxu0 0.0
    %519 = vmatprep.subr.mxu0 0.0
    %520 = vmatpush1.msra.mxu0 0.0
    %521 = vmatprep.subr.mxu0 0.0
    %522 = vmatpush1.msra.mxu0 0.0
    %523 = vmatprep.subr.mxu0 0.0
    %524 = vmatpush1.msra.mxu0 0.0
    %525 = vmatprep.subr.mxu0 0.0
    %526 = vmatpush1.msra.mxu0 0.0
    %527 = vmatprep.subr.mxu0 0.0
    %528 = vmatpush1.msra.mxu0 0.0
    %529 = vmatprep.subr.mxu0 0.0
    %530 = vmatpush1.msra.mxu0 0.0
    %531 = vmatprep.subr.mxu0 0.0
    %532 = vmatpush1.msra.mxu0 0.0
    %533 = vmatprep.subr.mxu0 0.0
    %534 = vmatpush1.msra.mxu0 0.0
    %535 = vmatprep.subr.mxu0 0.0
    %536 = vmatpush1.msra.mxu0 0.0
    %537 = vmatprep.subr.mxu0 0.0
    %538 = vmatpush1.msra.mxu0 0.0
    %539 = vmatprep.subr.mxu0 0.0
    %540 = vmatpush1.msra.mxu0 0.0
    %541 = vmatprep.mubr.f32.mxu0 0.0
    %542 = vmatmul.mubr.f32.gmra.mrb[0].mxu0 %v440
    %v543 = vpop.f32.mrb[0].mxu0
    %v544 = vadd.f32 %v476, %v543
    %v545 = vpop.f32.mrb[0].mxu0
    %546 = vmatprep.mubr.f32.mxu0 0.0
    %547 = vmatmul.mubr.f32.gmra.mrb[0].mxu0 %v441
    %v548 = vpop.f32.mrb[0].mxu0
    %v549 = vadd.f32 %v476, %v548
    %v550 = vpop.f32.mrb[0].mxu0
    %551 = vmatprep.mubr.f32.mxu0 0.0
    %552 = vmatmul.mubr.f32.gmra.mrb[0].mxu0 %v442
    %v553 = vpop.f32.mrb[0].mxu0
    %v554 = vadd.f32 %v476, %v553
    %v555 = vpop.f32.mrb[0].mxu0
    %556 = vmatprep.mubr.f32.mxu0 0.0
    %557 = vmatmul.mubr.f32.gmra.mrb[0].mxu0 %v443
    %v558 = vpop.f32.mrb[0].mxu0
    %v559 = vadd.f32 %v476, %v558
    %v560 = vpop.f32.mrb[0].mxu0
    %561 = vmatprep.mubr.f32.mxu0 0.0
    %562 = vmatmul.mubr.f32.gmra.mrb[0].mxu0 %v444
    %v563 = vpop.f32.mrb[0].mxu0
    %v564 = vadd.f32 %v476, %v563
    %v565 = vpop.f32.mrb[0].mxu0
    %566 = vmatprep.mubr.f32.mxu0 0.0
    %567 = vmatmul.mubr.f32.gmra.mrb[0].mxu0 %v445
    %v568 = vpop.f32.mrb[0].mxu0
    %v569 = vadd.f32 %v476, %v568
    %v570 = vpop.f32.mrb[0].mxu0
    %571 = vmatprep.mubr.f32.mxu0 0.0
    %572 = vmatmul.mubr.f32.gmra.mrb[0].mxu0 %v446
    %v573 = vpop.f32.mrb[0].mxu0
    %v574 = vadd.f32 %v476, %v573
    %v575 = vpop.f32.mrb[0].mxu0
    %576 = vmatprep.mubr.f32.mxu0 0.0
    %577 = vmatmul.mubr.f32.gmra.mrb[0].mxu0 %v447
    %v578 = vpop.f32.mrb[0].mxu0
    %v579 = vadd.f32 %v476, %v578
    %v580 = vpop.f32.mrb[0].mxu0
    %581 = vmatprep.mubr.f32.mxu0 0.0
    %582 = vmatmul.mubr.f32.gmra.mrb[0].mxu0 %v448
    %v583 = vpop.f32.mrb[0].mxu0
    %v584 = vadd.f32 %v476, %v583
    %v585 = vpop.f32.mrb[0].mxu0
    %586 = vmatprep.mubr.f32.mxu0 0.0
    %587 = vmatmul.mubr.f32.gmra.mrb[0].mxu0 %v449
    %v588 = vpop.f32.mrb[0].mxu0
    %v589 = vadd.f32 %v476, %v588
    %v590 = vpop.f32.mrb[0].mxu0
    %591 = vmatprep.mubr.f32.mxu0 0.0
    %592 = vmatmul.mubr.f32.gmra.mrb[0].mxu0 %v450
    %v593 = vpop.f32.mrb[0].mxu0
    %v594 = vadd.f32 %v476, %v593
    %v595 = vpop.f32.mrb[0].mxu0
    %596 = vmatprep.mubr.f32.mxu0 0.0
    %597 = vmatmul.mubr.f32.gmra.mrb[0].mxu0 %v451
    %v598 = vpop.f32.mrb[0].mxu0
    %v599 = vadd.f32 %v476, %v598
    %v600 = vpop.f32.mrb[0].mxu0
    %601 = vmatprep.mubr.f32.mxu0 0.0
    %602 = vmatmul.mubr.f32.gmra.mrb[0].mxu0 %v452
    %v603 = vpop.f32.mrb[0].mxu0
    %v604 = vadd.f32 %v476, %v603
    %v605 = vpop.f32.mrb[0].mxu0
    %606 = vmatprep.mubr.f32.mxu0 0.0
    %607 = vmatmul.mubr.f32.gmra.mrb[0].mxu0 %v453
    %v608 = vpop.f32.mrb[0].mxu0
    %v609 = vadd.f32 %v476, %v608
    %v610 = vpop.f32.mrb[0].mxu0
    %611 = vmatprep.mubr.f32.mxu0 0.0
    %612 = vmatmul.mubr.f32.gmra.mrb[0].mxu0 %v454
    %v613 = vpop.f32.mrb[0].mxu0
    %v614 = vadd.f32 %v476, %v613
    %v615 = vpop.f32.mrb[0].mxu0
    %616 = vmatprep.mubr.f32.mxu0 0.0
    %617 = vmatmul.mubr.f32.gmra.mrb[0].mxu0 %v455
    %v618 = vpop.f32.mrb[0].mxu0
    %v619 = vadd.f32 %v476, %v618
    %v620 = vpop.f32.mrb[0].mxu0
    %621 = vdwg.mxu0
    %622 = vst [vmem:[#allocation10] sm:$0xff] %v544
    %623 = vst [vmem:[#allocation10 + $0x8] sm:$0xff] %v549
    %624 = vst [vmem:[#allocation10 + $0x10] sm:$0xff] %v554
    %625 = vst [vmem:[#allocation10 + $0x18] sm:$0xff] %v559
    %626 = vst [vmem:[#allocation10 + $0x20] sm:$0xff] %v564
    %627 = vst [vmem:[#allocation10 + $0x28] sm:$0xff] %v569
    %628 = vst [vmem:[#allocation10 + $0x30] sm:$0xff] %v574
    %629 = vst [vmem:[#allocation10 + $0x38] sm:$0xff] %v579
    %630 = vst [vmem:[#allocation10 + $0x40] sm:$0xff] %v584
    %631 = vst [vmem:[#allocation10 + $0x48] sm:$0xff] %v589
    %632 = vst [vmem:[#allocation10 + $0x50] sm:$0xff] %v594
    %633 = vst [vmem:[#allocation10 + $0x58] sm:$0xff] %v599
    %634 = vst [vmem:[#allocation10 + $0x60] sm:$0xff] %v604
    %635 = vst [vmem:[#allocation10 + $0x68] sm:$0xff] %v609
    %636 = vst [vmem:[#allocation10 + $0x70] sm:$0xff] %v614
    %637 = vst [vmem:[#allocation10 + $0x78] sm:$0xff] %v619
    // Predicated region
    $region38: #{tpu_custom_call.1} parent=1 // pred_check
      _
    $region39: #{tpu_custom_call.1} parent=1 // pred_check_branch
      %639 = sbr.rel (0) target = $region41
    $region40: #{tpu_custom_call.1} parent=1 // pred_region
      %s641 = ssub.s32 2048, 2048
      %642 = vsyncadd [#allocation4], %s641
      %s643 = sshll.u32 [#allocation10], 4
      %s644 = int_to_ptr.vmem [resolvable:$true] %s643
      %649 = dma.vmem_to_hbm [thread:$0]  %s644, 2048, %s5, [#allocation4], 128, 128, 8
    $region41: #{tpu_custom_call.1} parent=1 // pred_fallthru
      _
    // Predicated region
    $region42: #{tpu_custom_call.1} parent=1 // pred_check
      _
    $region43: #{tpu_custom_call.1} parent=1 // pred_check_branch
      %651 = sbr.rel (0) target = $region45
    $region44: #{tpu_custom_call.1} parent=1 // pred_region
      %652 = dma.done [#allocation4], 2048
    $region45: #{tpu_custom_call.1} parent=1 // pred_fallthru
      _
    %653 = vsyncpa [#allocation3], 1
    %654 = vsyncpa [#allocation6], 1
    %655 = vsyncpa [#allocation9], 1
    %656 = vsyncpa [#allocation4], 1

</llo_original>
